<compile_context>
chip_gen: v7x
topology: tpu7x:2x2x1
jax: 0.10.0
libtpu: 0.0.40
codegen_flags: <defaults>
</compile_context>

<pallas_src>
import functools
import math

import jax
import jax.numpy as jnp
from jax.experimental import pallas as pl
from jax.experimental.pallas import tpu as pltpu


def _round_up(x, m):
    return ((x + m - 1) // m) * m


def _cdiv(a, b):
    return (a + b - 1) // b


def _dvn_kernel(xt_ref, w1t_ref, b1_ref, w2_ref, b2_ref, o_ref, *, chunk):
    # xt_ref:  (3, tile_n)   input tile, batch on the lane axis (lane-dense)
    # w1t_ref: (32, 3)       first linear weight, (out, in)
    # b1_ref:  (32, 1)       first linear bias (column)
    # w2_ref:  (32, 1)       second linear weight (column)
    # b2_ref:  (1, 1)        second linear bias
    # o_ref:   (1, tile_n)   output tile, batch on the lane axis (lane-dense)
    d_in, tile_n = xt_ref.shape
    d_h = w1t_ref.shape[0]
    n_chunks = tile_n // chunk

    # Hoist loop-invariant weight/bias broadcasts out of the chunk loop
    # (JAX does not CSE broadcast_in_dim inside loops).
    w1_b = [jnp.broadcast_to(w1t_ref[:, f:f + 1], (d_h, chunk)) for f in range(d_in)]
    b1_b = jnp.broadcast_to(b1_ref[...], (d_h, chunk))
    w2_b = jnp.broadcast_to(w2_ref[...], (d_h, chunk))
    b2 = b2_ref[...]                                    # (1, 1)

    @pl.loop(0, n_chunks)
    def _(c):
        off = pl.multiple_of(c * chunk, 128)
        # Layer 1 on the VPU: 3 broadcast multiply-adds -> dense (d_h, chunk) slab.
        h = b1_b
        for f in range(d_in):
            xf = xt_ref[f:f + 1, pl.ds(off, chunk)]     # (1, chunk), sublane-broadcasts
            h = h + xf * w1_b[f]
        h = jnp.maximum(h, 0.0)                         # ReLU
        # Layer 2: w2-weighted reduction over the hidden (sublane) axis -> (1, chunk).
        y = jnp.sum(h * w2_b, axis=0, keepdims=True) + b2
        o_ref[:, pl.ds(off, chunk)] = y.astype(o_ref.dtype)


def dvn_forward_feature_major(xt, w1, b1, w2, b2, *, tile_n=131072):
    """Zero-copy fast path: xt is (3, N) feature-major. Returns (1, N)."""
    d_in, n = xt.shape
    d_h = w1.shape[1]
    d_out = w2.shape[1]
    assert d_in == w1.shape[0] and d_h == w2.shape[0] and d_out == 1

    # Tile selection:
    #  * multiple of 128 lanes,
    #  * >=4 grid steps when the batch is big enough (v7x megacore + pipelining),
    #  * capped at 256K columns so the VMEM budget stays v7x-safe.
    n128 = _round_up(max(n, 1), 128)
    tile_cap = max(128, _round_up(_cdiv(n128, 4), 128))
    tile_n = max(128, min(_round_up(tile_n, 128), tile_cap, 262144))
    # In-kernel chunk: a multiple of 128 that divides tile_n (keeps intermediates small).
    chunk = math.gcd(tile_n, 1024)
    grid = (_cdiv(n, tile_n),)

    # Explicit VMEM budget: (3,tile) input and (1,tile) output blocks are both
    # sublane-padded to 8 rows and double-buffered (~128 B/column) + chunk temps.
    vmem_needed = 128 * tile_n + (4 << 20)
    vmem_limit = min(max(vmem_needed, 32 << 20), 56 << 20)   # <=56 MiB: safe on v7x (64 MiB)

    itemsize = jnp.dtype(xt.dtype).itemsize
    cost = pl.CostEstimate(
        flops=2 * n * (d_in * d_h + d_h * d_out),
        transcendentals=0,
        bytes_accessed=(n * (d_in + d_out)
                        + d_in * d_h + d_h + d_h * d_out + d_out) * itemsize,
    )

    kernel = functools.partial(_dvn_kernel, chunk=chunk)
    out = pl.pallas_call(
        kernel,
        out_shape=jax.ShapeDtypeStruct((d_out, n), xt.dtype),
        grid_spec=pltpu.PrefetchScalarGridSpec(
            num_scalar_prefetch=0,
            grid=grid,
            in_specs=[
                pl.BlockSpec((d_in, tile_n), lambda i: (0, i)),   # xt tile (lane-dense)
                pl.BlockSpec((d_h, d_in), lambda i: (0, 0)),      # W1^T (resident)
                pl.BlockSpec((d_h, 1), lambda i: (0, 0)),         # b1 column
                pl.BlockSpec((d_h, 1), lambda i: (0, 0)),         # w2 column
                pl.BlockSpec((d_out, 1), lambda i: (0, 0)),       # b2
            ],
            out_specs=pl.BlockSpec((d_out, tile_n), lambda i: (0, i)),
        ),
        compiler_params=pltpu.CompilerParams(
            dimension_semantics=("parallel",),
            vmem_limit_bytes=vmem_limit,
        ),
        cost_estimate=cost,
    )(xt,
      w1.T,                                   # (32, 3)
      jnp.asarray(b1).reshape(d_h, 1),        # (32, 1)
      jnp.asarray(w2).reshape(d_h, 1),        # (32, 1)
      jnp.asarray(b2).reshape(d_out, 1))      # (1, 1)
    return out


def dvn_forward(x, w1, b1, w2, b2, *, tile_n=131072):
    """PyTorch-shaped entry point: relu(x @ w1 + b1) @ w2 + b2 with x (N, 3) -> (N, 1)."""
    n = x.shape[0]
    # One transpose so the batch lands on the lane axis (no jnp.pad anymore).
    # TODO(synk): produce x feature-major upstream and call dvn_forward_feature_major
    # directly to remove this last wrapper-side HBM round trip of x.
    out = dvn_forward_feature_major(x.T, w1, b1, w2, b2, tile_n=tile_n)
    return out.reshape(n, 1)


def init_dvn_params(key, dtype=jnp.float32):
    """Deterministic init mirroring PyTorch nn.Linear default U(-1/sqrt(fan_in), 1/sqrt(fan_in))."""
    k1, k2, k3, k4 = jax.random.split(key, 4)
    d_in, d_hidden, d_out = 3, 32, 1

    bound1 = 1.0 / math.sqrt(d_in)
    w1 = jax.random.uniform(k1, (d_in, d_hidden), dtype, -bound1, bound1)
    b1 = jax.random.uniform(k2, (1, d_hidden), dtype, -bound1, bound1)

    bound2 = 1.0 / math.sqrt(d_hidden)
    w2 = jax.random.uniform(k3, (d_hidden, d_out), dtype, -bound2, bound2)
    b2 = jax.random.uniform(k4, (1, d_out), dtype, -bound2, bound2)
    return w1, b1, w2, b2


def dvn_reference(x, w1, b1, w2, b2):
    """Plain-JAX reference for correctness checking."""
    h = jnp.maximum(x @ w1 + b1, 0.0)
    return h @ w2 + b2


if __name__ == "__main__":
    key = jax.random.PRNGKey(0)
    k_params, k_x1, k_x2 = jax.random.split(key, 3)
    w1, b1, w2, b2 = init_dvn_params(k_params)

    # Two batch sizes: 200 exercises the ragged single-chunk path,
    # 8200 exercises multi-tile grid + multi-chunk in-kernel loop + ragged tail.
    for batch, kx in ((200, k_x1), (8200, k_x2)):
        x = jax.random.normal(kx, (batch, 3), dtype=jnp.float32)
        out = jax.block_until_ready(dvn_forward(x, w1, b1, w2, b2))
        ref = dvn_reference(x, w1, b1, w2, b2)
        assert out.shape == (batch, 1), out.shape
        assert jnp.allclose(out, ref, atol=1e-5, rtol=1e-5), \
            f"Pallas output mismatch vs reference at batch={batch}"

    print("KERNEL_OK")
</pallas_src>

<mosaic_0001>
module attributes {stable_mosaic.version = 11 : i64} {
  func.func @_dvn_kernel(%arg0: i32, %arg1: memref<3x128xf32, #tpu.memory_space<vmem>>, %arg2: memref<32x3xf32, #tpu.memory_space<vmem>>, %arg3: memref<32x1xf32, #tpu.memory_space<vmem>>, %arg4: memref<32x1xf32, #tpu.memory_space<vmem>>, %arg5: memref<1x1xf32, #tpu.memory_space<vmem>>, %arg6: memref<1x128xf32, #tpu.memory_space<vmem>>) attributes {dimension_semantics = [#tpu.dimension_semantics<parallel>], iteration_bounds = array<i64: 2>, scalar_prefetch = 0 : i64, scratch_operands = 0 : i64, tpu.core_type = #tpu.core_type<tc>, window_params = [{transform_indices = @transform_0, window_bounds = array<i64: 3, 128>}, {pipeline_mode = #tpu.pipeline_mode<synchronous>, transform_indices = @transform_1, window_bounds = array<i64: 32, 3>}, {pipeline_mode = #tpu.pipeline_mode<synchronous>, transform_indices = @transform_2, window_bounds = array<i64: 32, 1>}, {pipeline_mode = #tpu.pipeline_mode<synchronous>, transform_indices = @transform_3, window_bounds = array<i64: 32, 1>}, {pipeline_mode = #tpu.pipeline_mode<synchronous>, transform_indices = @transform_4, window_bounds = array<i64: 1, 1>}, {transform_indices = @transform_5, window_bounds = array<i64: 1, 128>}]} {
    %c0 = arith.constant 0 : index
    %c0_0 = arith.constant 0 : index
    %0 = vector.load %arg2[%c0, %c0_0] : memref<32x3xf32, #tpu.memory_space<vmem>>, vector<32x1xf32>
    %1 = vector.shape_cast %0 : vector<32x1xf32> to vector<32x1xf32>
    %2 = vector.broadcast %1 : vector<32x1xf32> to vector<32x128xf32>
    %c0_1 = arith.constant 0 : index
    %c1 = arith.constant 1 : index
    %3 = vector.load %arg2[%c0_1, %c1] : memref<32x3xf32, #tpu.memory_space<vmem>>, vector<32x1xf32>
    %4 = vector.shape_cast %3 : vector<32x1xf32> to vector<32x1xf32>
    %5 = vector.broadcast %4 : vector<32x1xf32> to vector<32x128xf32>
    %c0_2 = arith.constant 0 : index
    %c2 = arith.constant 2 : index
    %6 = vector.load %arg2[%c0_2, %c2] : memref<32x3xf32, #tpu.memory_space<vmem>>, vector<32x1xf32>
    %7 = vector.shape_cast %6 : vector<32x1xf32> to vector<32x1xf32>
    %8 = vector.broadcast %7 : vector<32x1xf32> to vector<32x128xf32>
    %c0_3 = arith.constant 0 : index
    %c0_4 = arith.constant 0 : index
    %9 = vector.load %arg3[%c0_3, %c0_4] : memref<32x1xf32, #tpu.memory_space<vmem>>, vector<32x1xf32>
    %10 = vector.shape_cast %9 : vector<32x1xf32> to vector<32x1xf32>
    %11 = vector.broadcast %10 : vector<32x1xf32> to vector<32x128xf32>
    %c0_5 = arith.constant 0 : index
    %c0_6 = arith.constant 0 : index
    %12 = vector.load %arg4[%c0_5, %c0_6] : memref<32x1xf32, #tpu.memory_space<vmem>>, vector<32x1xf32>
    %13 = vector.shape_cast %12 : vector<32x1xf32> to vector<32x1xf32>
    %14 = vector.broadcast %13 : vector<32x1xf32> to vector<32x128xf32>
    %c0_7 = arith.constant 0 : index
    %c0_8 = arith.constant 0 : index
    %15 = vector.load %arg5[%c0_7, %c0_8] : memref<1x1xf32, #tpu.memory_space<vmem>>, vector<1x1xf32>
    %c0_i32 = arith.constant 0 : i32
    %c1_i32 = arith.constant 1 : i32
    %16 = arith.muli %c0_i32, %c1_i32 : i32
    %c0_i32_9 = arith.constant 0 : i32
    %17 = arith.addi %c0_i32_9, %16 : i32
    %c128_i32 = arith.constant 128 : i32
    %18 = arith.muli %17, %c128_i32 : i32
    %19 = tpu.assume_multiple %18, 128 : i32
    %c0_10 = arith.constant 0 : index
    %20 = arith.index_cast %19 : i32 to index
    %21 = vector.load %arg1[%c0_10, %20] : memref<3x128xf32, #tpu.memory_space<vmem>>, vector<1x128xf32>
    %22 = vector.broadcast %21 : vector<1x128xf32> to vector<32x128xf32>
    %23 = arith.mulf %22, %2 : vector<32x128xf32>
    %24 = arith.addf %11, %23 : vector<32x128xf32>
    %c1_11 = arith.constant 1 : index
    %25 = arith.index_cast %19 : i32 to index
    %26 = vector.load %arg1[%c1_11, %25] : memref<3x128xf32, #tpu.memory_space<vmem>>, vector<1x128xf32>
    %27 = vector.broadcast %26 : vector<1x128xf32> to vector<32x128xf32>
    %28 = arith.mulf %27, %5 : vector<32x128xf32>
    %29 = arith.addf %24, %28 : vector<32x128xf32>
    %c2_12 = arith.constant 2 : index
    %30 = arith.index_cast %19 : i32 to index
    %31 = vector.load %arg1[%c2_12, %30] : memref<3x128xf32, #tpu.memory_space<vmem>>, vector<1x128xf32>
    %32 = vector.broadcast %31 : vector<1x128xf32> to vector<32x128xf32>
    %33 = arith.mulf %32, %8 : vector<32x128xf32>
    %34 = arith.addf %29, %33 : vector<32x128xf32>
    %cst = arith.constant 0.000000e+00 : f32
    %35 = vector.broadcast %cst : f32 to vector<32x128xf32>
    %36 = arith.maximumf %34, %35 : vector<32x128xf32>
    %37 = arith.mulf %36, %14 : vector<32x128xf32>
    %cst_13 = arith.constant dense<0.000000e+00> : vector<128xf32>
    %38 = vector.multi_reduction <add>, %37, %cst_13 [0] : vector<32x128xf32> to vector<128xf32>
    %39 = vector.shape_cast %38 : vector<128xf32> to vector<1x128xf32>
    %40 = vector.broadcast %15 : vector<1x1xf32> to vector<1x128xf32>
    %41 = arith.addf %39, %40 : vector<1x128xf32>
    %c0_14 = arith.constant 0 : index
    %42 = arith.index_cast %19 : i32 to index
    %43 = vector.load %arg6[%c0_14, %42] : memref<1x128xf32, #tpu.memory_space<vmem>>, vector<1x128xf32>
    tpu.vector_store %arg6[%c0_14, %42], %41 {strides = array<i32>} : memref<1x128xf32, #tpu.memory_space<vmem>>, vector<1x128xf32>,
    %c1_i32_15 = arith.constant 1 : i32
    return
  }
  func.func @transform_0(%arg0: i32) -> (i32, i32) {
    %c0_i32 = arith.constant 0 : i32
    %c0_i32_0 = arith.constant 0 : i32
    return %c0_i32, %arg0 : i32, i32
  }
  func.func @transform_1(%arg0: i32) -> (i32, i32) {
    %c0_i32 = arith.constant 0 : i32
    %c0_i32_0 = arith.constant 0 : i32
    %c0_i32_1 = arith.constant 0 : i32
    return %c0_i32, %c0_i32_0 : i32, i32
  }
  func.func @transform_2(%arg0: i32) -> (i32, i32) {
    %c0_i32 = arith.constant 0 : i32
    %c0_i32_0 = arith.constant 0 : i32
    %c0_i32_1 = arith.constant 0 : i32
    return %c0_i32, %c0_i32_0 : i32, i32
  }
  func.func @transform_3(%arg0: i32) -> (i32, i32) {
    %c0_i32 = arith.constant 0 : i32
    %c0_i32_0 = arith.constant 0 : i32
    %c0_i32_1 = arith.constant 0 : i32
    return %c0_i32, %c0_i32_0 : i32, i32
  }
  func.func @transform_4(%arg0: i32) -> (i32, i32) {
    %c0_i32 = arith.constant 0 : i32
    %c0_i32_0 = arith.constant 0 : i32
    %c0_i32_1 = arith.constant 0 : i32
    return %c0_i32, %c0_i32_0 : i32, i32
  }
  func.func @transform_5(%arg0: i32) -> (i32, i32) {
    %c0_i32 = arith.constant 0 : i32
    %c0_i32_0 = arith.constant 0 : i32
    return %c0_i32, %arg0 : i32, i32
  }
}

</mosaic_0001>

<llo_original>
// kernel: tpu_custom_call.1
$region0: #{tpu_custom_call.1}
  #allocation0 [shape = 'u32[]', space=smem, size = 0x4, offset = 0x4, fixed_abs, tag = 'smem constant byte address 0x4 - core index']
  #allocation1 [shape = 'u32[144,128]{1,0:T(1,128)}', space=vmem, size = 0x12000, scoped, tag = 'internal scratch']
  #allocation2 [shape = 'f32[1,1]{1,0:T(1,128)S(1)}', space=vmem, size = 0x200, scoped, tag = 'scoped memory for tpu_custom_call.1']
  %s0 = inlined_call_operand.vmem [shape: f32[3,200], index: 0, kind: input, shape index: {}]
  %s1 = inlined_call_operand.vmem [shape: f32[32,3], index: 1, kind: input, shape index: {}]
  %s2 = inlined_call_operand.vmem [shape: f32[32,1], index: 2, kind: input, shape index: {}]
  %s3 = inlined_call_operand.vmem [shape: f32[32,1], index: 3, kind: input, shape index: {}]
  %s4 = inlined_call_operand.<no memory space> [shape: f32[1,1], index: 4, kind: input, shape index: {}]
  %s5 = inlined_call_operand.hbm [shape: f32[1,200], index: 5, kind: output, shape index: {}]
  %s6 = sld [smem:[#allocation0]]
  $region53: #{tpu_custom_call.1} parent=0
    _
  %s8 = ssub.s32 1, %s6
  %s9 = scalar_select 0, %s8, %s6
  %v10 = vstv %s4
  %11 = vst [vmem:[#allocation2] sm:$0x1] %v10
  $region1: #{tpu_custom_call.1} parent=0
    #allocation3 [shape = 'u8[1024]{0}', space=vmem, size = 0x400, scoped, tag = 'output window, operand 0']
    #allocation4 [shape = 's32[2]{0}', space=sflag, size = 0x8, scoped, tag = 'scoped memory for tpu_custom_call.1']
    %12 = vsyncpa [#allocation4], 0
    %s13 = scalar_lea.sflag [#allocation4], 1
    %14 = vsyncpa %s13, 0
    loop: start=0, step=1, limit=4
    $region2: #{tpu_custom_call.1} parent=1 // loop_pre_header
      _
    $region3: #{tpu_custom_call.1} parent=1 // loop_header
      %s16 = sphi 0, %s20
      %p17 = scmp.ge.s32.totalorder %s16, 4
      %s26 = sphi 0, %s28
      %s29 = sphi 0, %s26
      %s30 = sphi 0, %s29
      %s46 = sphi 0, %s30
      %s50 = sphi 0, %s50
      %s52 = sphi 0, %s50
      %s53 = sphi 0, %s52
      %s67 = sphi 0, %s53
      %s71 = sphi 0, %s71
      %s73 = sphi 0, %s71
      %s74 = sphi 0, %s73
      %s88 = sphi 0, %s74
      %s92 = sphi 0, %s92
      %s94 = sphi 0, %s92
      %s95 = sphi 0, %s94
      %s109 = sphi 0, %s95
      %s113 = sphi 0, %s113
      %s115 = sphi 0, %s113
      %s116 = sphi 0, %s115
      %s130 = sphi 0, %s116
      %s136 = sphi 0, %s138
      %s139 = sphi 0, %s136
      %s140 = sphi 0, %s139
      %s156 = sphi 0, %s140
    $region4: #{tpu_custom_call.1} parent=1 // loop_header_branch
      %19 = sbr.rel (%p17) target = $region8
    $region5: #{tpu_custom_call.1} parent=1 // loop_body
      %s21 = ssub.s32 %s16, 1
      %s22 = ssub.s32 %s16, 2
      %s23 = sadd.s32 %s16, 1
      %s24 = ssub.s32 %s16, %s23
      %p25 = scmp.eq.s32.totalorder %s24, 0
      %s27 = sadd.s32 %s26, 1
      %s28 = scalar_select %p25, %s26, %s27
      %p31 = pneg %p25
      %p32 = scmp.eq.s32.totalorder %s16, 1
      %p33 = por %p31, %p32
      %p34 = scmp.ne.s32.totalorder %s26, %s29
      %p35 = scmp.eq.s32.totalorder %s16, 0
      %p36 = por %p34, %p35
      %p37 = scmp.ne.s32.totalorder %s26, %s29
      %p38 = scmp.eq.s32.totalorder %s21, 1
      %p39 = por %p37, %p38
      %p40 = scmp.ne.s32.totalorder %s29, %s30
      %p41 = scmp.eq.s32.totalorder %s21, 0
      %p42 = por %p40, %p41
      %p43 = scmp.ne.s32.totalorder %s29, %s30
      %p44 = scmp.eq.s32.totalorder %s22, 1
      %p45 = por %p43, %p44
      %p47 = scmp.ne.s32.totalorder %s30, %s46
      %p48 = scmp.eq.s32.totalorder %s22, 0
      %p49 = por %p47, %p48
      %s51 = sadd.s32 %s50, 1
      %p54 = scmp.eq.s32.totalorder %s16, 1
      %p55 = scmp.ne.s32.totalorder %s50, %s52
      %p56 = scmp.eq.s32.totalorder %s16, 0
      %p57 = por %p55, %p56
      %p58 = scmp.ne.s32.totalorder %s50, %s52
      %p59 = scmp.eq.s32.totalorder %s21, 1
      %p60 = por %p58, %p59
      %p61 = scmp.ne.s32.totalorder %s52, %s53
      %p62 = scmp.eq.s32.totalorder %s21, 0
      %p63 = por %p61, %p62
      %p64 = scmp.ne.s32.totalorder %s52, %s53
      %p65 = scmp.eq.s32.totalorder %s22, 1
      %p66 = por %p64, %p65
      %p68 = scmp.ne.s32.totalorder %s53, %s67
      %p69 = scmp.eq.s32.totalorder %s22, 0
      %p70 = por %p68, %p69
      %s72 = sadd.s32 %s71, 1
      %p75 = scmp.eq.s32.totalorder %s16, 1
      %p76 = scmp.ne.s32.totalorder %s71, %s73
      %p77 = scmp.eq.s32.totalorder %s16, 0
      %p78 = por %p76, %p77
      %p79 = scmp.ne.s32.totalorder %s71, %s73
      %p80 = scmp.eq.s32.totalorder %s21, 1
      %p81 = por %p79, %p80
      %p82 = scmp.ne.s32.totalorder %s73, %s74
      %p83 = scmp.eq.s32.totalorder %s21, 0
      %p84 = por %p82, %p83
      %p85 = scmp.ne.s32.totalorder %s73, %s74
      %p86 = scmp.eq.s32.totalorder %s22, 1
      %p87 = por %p85, %p86
      %p89 = scmp.ne.s32.totalorder %s74, %s88
      %p90 = scmp.eq.s32.totalorder %s22, 0
      %p91 = por %p89, %p90
      %s93 = sadd.s32 %s92, 1
      %p96 = scmp.eq.s32.totalorder %s16, 1
      %p97 = scmp.ne.s32.totalorder %s92, %s94
      %p98 = scmp.eq.s32.totalorder %s16, 0
      %p99 = por %p97, %p98
      %p100 = scmp.ne.s32.totalorder %s92, %s94
      %p101 = scmp.eq.s32.totalorder %s21, 1
      %p102 = por %p100, %p101
      %p103 = scmp.ne.s32.totalorder %s94, %s95
      %p104 = scmp.eq.s32.totalorder %s21, 0
      %p105 = por %p103, %p104
      %p106 = scmp.ne.s32.totalorder %s94, %s95
      %p107 = scmp.eq.s32.totalorder %s22, 1
      %p108 = por %p106, %p107
      %p110 = scmp.ne.s32.totalorder %s95, %s109
      %p111 = scmp.eq.s32.totalorder %s22, 0
      %p112 = por %p110, %p111
      %s114 = sadd.s32 %s113, 1
      %p117 = scmp.eq.s32.totalorder %s16, 1
      %p118 = scmp.ne.s32.totalorder %s113, %s115
      %p119 = scmp.eq.s32.totalorder %s16, 0
      %p120 = por %p118, %p119
      %p121 = scmp.ne.s32.totalorder %s113, %s115
      %p122 = scmp.eq.s32.totalorder %s21, 1
      %p123 = por %p121, %p122
      %p124 = scmp.ne.s32.totalorder %s115, %s116
      %p125 = scmp.eq.s32.totalorder %s21, 0
      %p126 = por %p124, %p125
      %p127 = scmp.ne.s32.totalorder %s115, %s116
      %p128 = scmp.eq.s32.totalorder %s22, 1
      %p129 = por %p127, %p128
      %p131 = scmp.ne.s32.totalorder %s116, %s130
      %p132 = scmp.eq.s32.totalorder %s22, 0
      %p133 = por %p131, %p132
      %s134 = ssub.s32 %s16, %s23
      %p135 = scmp.eq.s32.totalorder %s134, 0
      %s137 = sadd.s32 %s136, 1
      %s138 = scalar_select %p135, %s136, %s137
      %p141 = pneg %p135
      %p142 = scmp.eq.s32.totalorder %s16, 1
      %p143 = por %p141, %p142
      %p144 = scmp.ne.s32.totalorder %s136, %s139
      %p145 = scmp.eq.s32.totalorder %s16, 0
      %p146 = por %p144, %p145
      %p147 = scmp.ne.s32.totalorder %s136, %s139
      %p148 = scmp.eq.s32.totalorder %s21, 1
      %p149 = por %p147, %p148
      %p150 = scmp.ne.s32.totalorder %s139, %s140
      %p151 = scmp.eq.s32.totalorder %s21, 0
      %p152 = por %p150, %p151
      %p153 = scmp.ne.s32.totalorder %s139, %s140
      %p154 = scmp.eq.s32.totalorder %s22, 1
      %p155 = por %p153, %p154
      %p157 = scmp.ne.s32.totalorder %s140, %s156
      %p158 = scmp.eq.s32.totalorder %s22, 0
      %p159 = por %p157, %p158
      %p160 = scmp.le.s32.totalorder 1, %s16
      %p161 = scmp.lt.s32.totalorder %s16, 3
      %p162 = pnand %p160, %p161
      %p163 = pneg %p162
      // Predicated region
      $region9: #{tpu_custom_call.1} parent=5 // pred_check
        _
      $region10: #{tpu_custom_call.1} parent=5 // pred_check_branch
        %165 = sbr.rel (%p162) target = $region12
      $region11: #{tpu_custom_call.1} parent=5 // pred_region
        %s166 = ssub.s32 %s16, 1
        // Predicated region
        $region13: #{tpu_custom_call.1} parent=11 // pred_check
          %p167 = pneg %p63
        $region14: #{tpu_custom_call.1} parent=11 // pred_check_branch
          %169 = sbr.rel (%p167) target = $region16
        $region15: #{tpu_custom_call.1} parent=11 // pred_region
          _
        $region16: #{tpu_custom_call.1} parent=11 // pred_fallthru
          _
        // Predicated region
        $region17: #{tpu_custom_call.1} parent=11 // pred_check
          %p170 = pneg %p84
        $region18: #{tpu_custom_call.1} parent=11 // pred_check_branch
          %172 = sbr.rel (%p170) target = $region20
        $region19: #{tpu_custom_call.1} parent=11 // pred_region
          _
        $region20: #{tpu_custom_call.1} parent=11 // pred_fallthru
          _
        // Predicated region
        $region21: #{tpu_custom_call.1} parent=11 // pred_check
          %p173 = pneg %p105
        $region22: #{tpu_custom_call.1} parent=11 // pred_check_branch
          %175 = sbr.rel (%p173) target = $region24
        $region23: #{tpu_custom_call.1} parent=11 // pred_region
          _
        $region24: #{tpu_custom_call.1} parent=11 // pred_fallthru
          _
        // Predicated region
        $region25: #{tpu_custom_call.1} parent=11 // pred_check
          %p176 = pneg %p126
        $region26: #{tpu_custom_call.1} parent=11 // pred_check_branch
          %178 = sbr.rel (%p176) target = $region28
        $region27: #{tpu_custom_call.1} parent=11 // pred_region
          _
        $region28: #{tpu_custom_call.1} parent=11 // pred_fallthru
          _
      $region12: #{tpu_custom_call.1} parent=5 // pred_fallthru
        _
      %p179 = scmp.lt.s32.totalorder %s16, 2
      // Predicated region
      $region29: #{tpu_custom_call.1} parent=5 // pred_check
        %p180 = pneg %p179
      $region30: #{tpu_custom_call.1} parent=5 // pred_check_branch
        %182 = sbr.rel (%p180) target = $region32
      $region31: #{tpu_custom_call.1} parent=5 // pred_region
        // Predicated region
        $region33: #{tpu_custom_call.1} parent=31 // pred_check
          %p183 = pneg %p36
        $region34: #{tpu_custom_call.1} parent=31 // pred_check_branch
          %185 = sbr.rel (%p183) target = $region36
        $region35: #{tpu_custom_call.1} parent=31 // pred_region
          %p186 = scmp.lt.s32.totalorder %s16, 1
          %s187 = scalar_select %p186, %s16, 1
          %s188 = smul.addr %s187, 4
          %s189 = scalar_lea.vmem %s0, %s188
        $region36: #{tpu_custom_call.1} parent=31 // pred_fallthru
          _
      $region32: #{tpu_custom_call.1} parent=5 // pred_fallthru
        _
      %p190 = scmp.le.s32.totalorder 1, %s16
      %p191 = scmp.lt.s32.totalorder %s16, 3
      %p192 = pnand %p190, %p191
      %p193 = pneg %p192
      // Predicated region
      $region37: #{tpu_custom_call.1} parent=5 // pred_check
        _
      $region38: #{tpu_custom_call.1} parent=5 // pred_check_branch
        %195 = sbr.rel (%p192) target = $region40
      $region39: #{tpu_custom_call.1} parent=5 // pred_region
        %s196 = ssub.s32 %s16, 1
        %p197 = scmp.lt.s32.totalorder %s21, 1
        %s198 = scalar_select %p197, %s21, 1
        %s199 = smul.addr %s198, 4
        %s200 = scalar_lea.vmem %s0, %s199
        %p201 = pneg %p42
        %p202 = pneg %p39
        %p203 = pneg %p63
        %p204 = pneg %p60
        %p205 = pneg %p84
        %p206 = pneg %p81
        %p207 = pneg %p105
        %p208 = pneg %p102
        %p209 = pneg %p126
        %p210 = pneg %p123
        %p211 = pneg %p152
        %p212 = pneg %p149
        %s213 = sand.u32 %s139, 1
        %s214 = scalar_lea.sflag [#allocation4], %s213
        %s215 = sand.u32 %s139, 1
        %s216 = scalar_lea.vmem [#allocation3], %s215
        %p217 = scmp.lt.s32.totalorder %s21, 1
        %s218 = scalar_select %p217, %s21, 1
        %s219 = smul.addr %s218, 4
        %s220 = scalar_lea.vmem %s0, %s219
        %v221 = vld [vmem:[%s1] sm:$0xff]
        %v222 = vld [vmem:[%s1 + $0x8] sm:$0xff]
        %v223 = vld [vmem:[%s1 + $0x10] sm:$0xff]
        %v224 = vld [vmem:[%s1 + $0x18] sm:$0xff]
        %226 = vset.pattern.permute.xlu0 0
        %227 = vperm.xlu0 %226, %v221
        %v228 = vpop.permute.xlu0 %227
        %231 = vset.pattern.permute.xlu0 0
        %232 = vperm.xlu0 %231, %v222
        %v233 = vpop.permute.xlu0 %232
        %236 = vset.pattern.permute.xlu0 0
        %237 = vperm.xlu0 %236, %v223
        %v238 = vpop.permute.xlu0 %237
        %241 = vset.pattern.permute.xlu0 0
        %242 = vperm.xlu0 %241, %v224
        %v243 = vpop.permute.xlu0 %242
        %245 = vset.pattern.permute.xlu0 1
        %246 = vperm.xlu0 %245, %v221
        %v247 = vpop.permute.xlu0 %246
        %249 = vset.pattern.permute.xlu0 1
        %250 = vperm.xlu0 %249, %v222
        %v251 = vpop.permute.xlu0 %250
        %253 = vset.pattern.permute.xlu0 1
        %254 = vperm.xlu0 %253, %v223
        %v255 = vpop.permute.xlu0 %254
        %257 = vset.pattern.permute.xlu0 1
        %258 = vperm.xlu0 %257, %v224
        %v259 = vpop.permute.xlu0 %258
        %261 = vset.pattern.permute.xlu0 2
        %262 = vperm.xlu0 %261, %v221
        %v263 = vpop.permute.xlu0 %262
        %265 = vset.pattern.permute.xlu0 2
        %266 = vperm.xlu0 %265, %v222
        %v267 = vpop.permute.xlu0 %266
        %269 = vset.pattern.permute.xlu0 2
        %270 = vperm.xlu0 %269, %v223
        %v271 = vpop.permute.xlu0 %270
        %273 = vset.pattern.permute.xlu0 2
        %274 = vperm.xlu0 %273, %v224
        %v275 = vpop.permute.xlu0 %274
        %v277 = vld [vmem:[%s2] sm:$0xff]
        %v278 = vld [vmem:[%s2 + $0x8] sm:$0xff]
        %v279 = vld [vmem:[%s2 + $0x10] sm:$0xff]
        %v280 = vld [vmem:[%s2 + $0x18] sm:$0xff]
        %282 = vset.pattern.permute.xlu0 0
        %283 = vperm.xlu0 %282, %v277
        %v284 = vpop.permute.xlu0 %283
        %287 = vset.pattern.permute.xlu0 0
        %288 = vperm.xlu0 %287, %v278
        %v289 = vpop.permute.xlu0 %288
        %292 = vset.pattern.permute.xlu0 0
        %293 = vperm.xlu0 %292, %v279
        %v294 = vpop.permute.xlu0 %293
        %297 = vset.pattern.permute.xlu0 0
        %298 = vperm.xlu0 %297, %v280
        %v299 = vpop.permute.xlu0 %298
        %v301 = vld [vmem:[%s3] sm:$0xff]
        %v302 = vld [vmem:[%s3 + $0x8] sm:$0xff]
        %v303 = vld [vmem:[%s3 + $0x10] sm:$0xff]
        %v304 = vld [vmem:[%s3 + $0x18] sm:$0xff]
        %306 = vset.pattern.permute.xlu0 0
        %307 = vperm.xlu0 %306, %v301
        %v308 = vpop.permute.xlu0 %307
        %311 = vset.pattern.permute.xlu0 0
        %312 = vperm.xlu0 %311, %v302
        %v313 = vpop.permute.xlu0 %312
        %316 = vset.pattern.permute.xlu0 0
        %317 = vperm.xlu0 %316, %v303
        %v318 = vpop.permute.xlu0 %317
        %321 = vset.pattern.permute.xlu0 0
        %322 = vperm.xlu0 %321, %v304
        %v323 = vpop.permute.xlu0 %322
        %v325 = vld [vmem:[#allocation2] sm:$0x1]
        %v326 = vld [vmem:[%s220] sm:$0x1]
        %v327 = vlaneseq
        %v328 = vshrl.u32 %v327, 7
        %v329 = vsub.s32 0, %v328
        %v330 = vrot.slane %v326, %v329
        %v331 = vmul.f32 %v330, %v228
        %v332 = vmul.f32 %v330, %v233
        %v333 = vmul.f32 %v330, %v238
        %v334 = vmul.f32 %v330, %v243
        %v335 = vadd.f32 %v284, %v331
        %v336 = vadd.f32 %v289, %v332
        %v337 = vadd.f32 %v294, %v333
        %v338 = vadd.f32 %v299, %v334
        %v339 = vld [vmem:[%s220 + $0x1] sm:$0x1]
        %v340 = vlaneseq
        %v341 = vshrl.u32 %v340, 7
        %v342 = vsub.s32 0, %v341
        %v343 = vrot.slane %v339, %v342
        %v344 = vmul.f32 %v343, %v247
        %v345 = vmul.f32 %v343, %v251
        %v346 = vmul.f32 %v343, %v255
        %v347 = vmul.f32 %v343, %v259
        %v348 = vadd.f32 %v335, %v344
        %v349 = vadd.f32 %v336, %v345
        %v350 = vadd.f32 %v337, %v346
        %v351 = vadd.f32 %v338, %v347
        %v352 = vld [vmem:[%s220 + $0x2] sm:$0x1]
        %v353 = vlaneseq
        %v354 = vshrl.u32 %v353, 7
        %v355 = vsub.s32 0, %v354
        %v356 = vrot.slane %v352, %v355
        %v357 = vmul.f32 %v356, %v263
        %v358 = vmul.f32 %v356, %v267
        %v359 = vmul.f32 %v356, %v271
        %v360 = vmul.f32 %v356, %v275
        %v361 = vadd.f32 %v348, %v357
        %v362 = vadd.f32 %v349, %v358
        %v363 = vadd.f32 %v350, %v359
        %v364 = vadd.f32 %v351, %v360
        %v365 = vmax.f32 %v361, 0.0
        %v366 = vmax.f32 %v362, 0.0
        %v367 = vmax.f32 %v363, 0.0
        %v368 = vmax.f32 %v364, 0.0
        %v369 = vmul.f32 %v365, %v308
        %v370 = vmul.f32 %v366, %v313
        %v371 = vmul.f32 %v367, %v318
        %v372 = vmul.f32 %v368, %v323
        %v373 = vadd.f32 %v369, %v370
        %v374 = vadd.f32 %v373, %v371
        %v375 = vadd.f32 %v374, %v372
        %v376 = vrot.slane %v375, 4
        %v377 = vadd.f32 %v375, %v376
        %v378 = vrot.slane %v377, 2
        %v379 = vadd.f32 %v377, %v378
        %v380 = vrot.slane %v379, 1
        %v381 = vadd.f32 %v379, %v380
        %383 = vset.pattern.permute.xlu0 0
        %384 = vperm.xlu0 %383, %v325
        %v385 = vpop.permute.xlu0 %384
        %v387 = vlaneseq
        %v388 = vshrl.u32 %v387, 7
        %v389 = vsub.s32 0, %v388
        %v390 = vrot.slane %v385, %v389
        %v391 = vadd.f32 %v381, %v390
        %392 = vst [vmem:[%s216] sm:$0x1] %v391
        %s393 = sand.u32 %s139, 1
        %s394 = scalar_lea.sflag [#allocation4], %s393
        %s395 = sand.u32 %s139, 1
        %s396 = scalar_lea.vmem [#allocation3], %s395
        // Predicated region
        $region41: #{tpu_custom_call.1} parent=39 // pred_check
          %p397 = pneg %p149
        $region42: #{tpu_custom_call.1} parent=39 // pred_check_branch
          %399 = sbr.rel (%p397) target = $region44
        $region43: #{tpu_custom_call.1} parent=39 // pred_region
          %s401 = ssub.s32 16, 16
          %402 = vsyncadd %s394, %s401
          %s403 = smul.addr %s21, 16
          %s404 = scalar_lea.hbm %s5, %s403
          %s406 = sshll.u32 %s396, 4
          %s407 = int_to_ptr.vmem [resolvable:$true] %s406
          %409 = dma.vmem_to_hbm [thread:$0]  %s407, 16, %s404, %s394
        $region44: #{tpu_custom_call.1} parent=39 // pred_fallthru
          _
      $region40: #{tpu_custom_call.1} parent=5 // pred_fallthru
        _
      %p410 = scmp.le.s32.totalorder 2, %s16
      // Predicated region
      $region45: #{tpu_custom_call.1} parent=5 // pred_check
        %p411 = pneg %p410
      $region46: #{tpu_custom_call.1} parent=5 // pred_check_branch
        %413 = sbr.rel (%p411) target = $region48
      $region47: #{tpu_custom_call.1} parent=5 // pred_region
        %s414 = ssub.s32 %s16, 2
        // Predicated region
        $region49: #{tpu_custom_call.1} parent=47 // pred_check
          %p415 = pneg %p155
        $region50: #{tpu_custom_call.1} parent=47 // pred_check_branch
          %417 = sbr.rel (%p415) target = $region52
        $region51: #{tpu_custom_call.1} parent=47 // pred_region
          %s418 = sand.u32 %s140, 1
          %s419 = scalar_lea.sflag [#allocation4], %s418
          %s420 = sand.u32 %s140, 1
          %s421 = scalar_lea.vmem [#allocation3], %s420
          %422 = dma.done %s419, 16
        $region52: #{tpu_custom_call.1} parent=47 // pred_fallthru
          _
      $region48: #{tpu_custom_call.1} parent=5 // pred_fallthru
        _
    $region6: #{tpu_custom_call.1} parent=1 // loop_footer
      %s20 = sadd.s32 1, %s16
    $region7: #{tpu_custom_call.1} parent=1 // loop_footer_branch
      %15 = sbr.rel target = $region3
    $region8: #{tpu_custom_call.1} parent=1 // loop_exit
      _
    %423 = vsyncpa [#allocation4], 1
    %s424 = scalar_lea.sflag [#allocation4], 1
    %425 = vsyncpa %s424, 1

</llo_original>
